<compile_context>
chip_gen: v7x
topology: tpu7x:2x2x1
jax: 0.10.0
libtpu: 0.0.40
codegen_flags: <defaults>
</compile_context>

<pallas_src>
import functools
import math

import jax
import jax.numpy as jnp
from jax.experimental import pallas as pl
from jax.experimental.pallas import tpu as pltpu


def _kl_sce_kernel(pm_ref, pa_ref, lbl_ref, out_ref, acc_ref, *, alpha, beta, hw_true):
    b = pl.program_id(1)
    t = pl.program_id(2)
    nb = pl.num_programs(1)
    nt = pl.num_programs(2)

    @pl.when(jnp.logical_and(b == 0, t == 0))
    def _():
        acc_ref[...] = jnp.zeros_like(acc_ref)

    pm = pm_ref[...].astype(jnp.float32)   # (C, TN) logits of pred_main
    pa = pa_ref[...].astype(jnp.float32)   # (C, TN) logits of pred_aux
    lbl = lbl_ref[...]                     # (1, TN) int32 class labels
    C, TN = pm.shape

    def softmax_pair(x):
        # returns (log_softmax, softmax) reusing the same exponentials
        m = jnp.max(x, axis=0, keepdims=True)
        z = x - m
        e = jnp.exp(z)
        s = jnp.sum(e, axis=0, keepdims=True)
        return z - jnp.log(s), e / s

    log_p, p = softmax_pair(pm)
    log_q, q = softmax_pair(pa)

    # one-hot of labels along channel (sublane) axis
    ch = jax.lax.broadcasted_iota(jnp.int32, (C, TN), 0)
    onehot = (ch == lbl).astype(jnp.float32)

    # CrossEntropyLoss(reduction='none') = -log_softmax(pred_main)[gt]
    ce = -jnp.sum(onehot * log_p, axis=0, keepdims=True)           # (1, TN)

    # RCE = -mean_c( clamp(p,1e-7,1) * log(clamp(onehot,1e-4,1)) )
    #     = (-log(1e-4)/C) * (sum_c p_cl - p_cl[gt])
    p_cl = jnp.clip(p, 1e-7, 1.0)
    sum_p = jnp.sum(p_cl, axis=0, keepdims=True)                   # (1, TN)
    p_gt = jnp.sum(onehot * p_cl, axis=0, keepdims=True)           # (1, TN)
    rce = (-math.log(1e-4) / C) * (sum_p - p_gt)

    sce = alpha * ce + beta * rce                                  # (1, TN)

    # variance = sum_c KLDiv(log_softmax(pred_main), softmax(pred_aux))
    var = jnp.sum(q * (log_q - log_p), axis=0, keepdims=True)      # (1, TN)
    per_pix = sce * jnp.exp(-var) + var                            # (1, TN)

    # mask lanes past the true spatial extent (ragged last tile / odd split)
    tile = pl.program_id(0) * nt + t
    lane = jax.lax.broadcasted_iota(jnp.int32, (1, TN), 1)
    valid = (tile * TN + lane) < hw_true
    acc_ref[...] += jnp.where(valid, per_pix, 0.0)

    @pl.when(jnp.logical_and(b == nb - 1, t == nt - 1))
    def _():
        out_ref[...] = acc_ref[...]


def kl_sce_loss(pred_main, pred_aux, label, alpha=0.1, beta=1.0):
    """pred_main, pred_aux: [B, C, *spatial] float logits; label: [B, 1, *spatial] or [B, *spatial]."""
    B, C = int(pred_main.shape[0]), int(pred_main.shape[1])
    spatial = pred_main.shape[2:]
    HW = int(math.prod(int(s) for s in spatial))

    # Free reshapes only — keep native layout, keep native dtype (bf16 stays bf16).
    pm = pred_main.reshape(B, C, HW)
    pa = pred_aux.reshape(B, C, HW)
    if label.ndim == pred_main.ndim:
        lbl = label[:, 0]
    else:
        lbl = label
    lbl = lbl.astype(jnp.int32).reshape(B, 1, HW)

    # Tile sizing: large lane tile, multiple of 128, bounded by a VMEM budget
    # (2 logit arrays x 2 pipeline buffers) that is safe on all generations.
    LANE = 128
    hw_lanes = ((HW + LANE - 1) // LANE) * LANE
    TN = min(8192, hw_lanes)
    bytes_per_lane_col = 2 * 2 * C * pred_main.dtype.itemsize
    max_tn = max(LANE, ((8 << 20) // max(1, bytes_per_lane_col)) // LANE * LANE)
    TN = min(TN, max_tn)

    n_tiles = -(-HW // TN)          # ceil
    T = (n_tiles + 1) // 2          # tiles per parallel half

    def data_map(g, b, t):
        # clamp so out-of-range tiles (odd split) re-read a valid block; those
        # lanes are fully masked inside the kernel.
        return (b, 0, jnp.minimum(g * T + t, n_tiles - 1))

    kernel = functools.partial(
        _kl_sce_kernel, alpha=float(alpha), beta=float(beta), hw_true=HW
    )

    out = pl.pallas_call(
        kernel,
        out_shape=jax.ShapeDtypeStruct((2, 1, TN), jnp.float32),
        grid_spec=pltpu.PrefetchScalarGridSpec(
            num_scalar_prefetch=0,
            grid=(2, B, T),
            in_specs=[
                pl.BlockSpec((None, C, TN), data_map),
                pl.BlockSpec((None, C, TN), data_map),
                pl.BlockSpec((None, 1, TN), data_map),
            ],
            out_specs=pl.BlockSpec((None, 1, TN), lambda g, b, t: (g, 0, 0)),
            scratch_shapes=[pltpu.VMEM((1, TN), jnp.float32)],
        ),
        compiler_params=pltpu.CompilerParams(
            dimension_semantics=("parallel", "arbitrary", "arbitrary")
        ),
    )(pm, pa, lbl)

    # Final tiny reduction (2 * TN floats) + global mean in the wrapper.
    return jnp.sum(out) / jnp.float32(B * HW)


def _reference_loss(pred_main, pred_aux, label, alpha=0.1, beta=1.0):
    """Pure-JAX reference mirroring the PyTorch forward."""
    log_p = jax.nn.log_softmax(pred_main, axis=1)
    p = jnp.clip(jax.nn.softmax(pred_main, axis=1), 1e-7, 1.0)
    log_q = jax.nn.log_softmax(pred_aux, axis=1)
    q = jax.nn.softmax(pred_aux, axis=1)
    gt = label.astype(jnp.int32)                               # [B,1,H,W]
    C = pred_main.shape[1]
    onehot = jax.nn.one_hot(gt[:, 0], C, axis=1)               # [B,C,H,W]
    ce = -jnp.take_along_axis(log_p, gt, axis=1)[:, 0]         # [B,H,W]
    rce = -jnp.mean(p * jnp.log(jnp.clip(onehot, 1e-4, 1.0)), axis=1)
    sce = alpha * ce + beta * rce
    var = jnp.sum(q * (log_q - log_p), axis=1)
    return jnp.mean(sce * jnp.exp(-var) + var)


if __name__ == "__main__":
    key = jax.random.PRNGKey(0)
    k1, k2, k3 = jax.random.split(key, 3)

    B, C, H, W = 2, 4, 16, 16
    pred_main = jax.random.normal(k1, (B, C, H, W), dtype=jnp.float32)
    pred_aux = jax.random.normal(k2, (B, C, H, W), dtype=jnp.float32)
    label = jax.random.randint(k3, (B, 1, H, W), 0, C).astype(jnp.float32)

    loss = kl_sce_loss(pred_main, pred_aux, label, alpha=0.1, beta=1.0)
    loss = jax.block_until_ready(loss)

    ref = jax.block_until_ready(_reference_loss(pred_main, pred_aux, label, 0.1, 1.0))
    assert jnp.allclose(loss, ref, rtol=1e-5, atol=1e-5), (loss, ref)

    print("KERNEL_OK")
</pallas_src>

<mosaic_0001>
module attributes {stable_mosaic.version = 11 : i64} {
  func.func @_kl_sce_kernel(%arg0: i32, %arg1: i32, %arg2: i32, %arg3: memref<1x4x256xf32, #tpu.memory_space<vmem>>, %arg4: memref<1x4x256xf32, #tpu.memory_space<vmem>>, %arg5: memref<1x1x256xi32, #tpu.memory_space<vmem>>, %arg6: memref<1x1x256xf32, #tpu.memory_space<vmem>>, %arg7: memref<1x256xf32, #tpu.memory_space<vmem>>) attributes {dimension_semantics = [#tpu.dimension_semantics<parallel>, #tpu.dimension_semantics<arbitrary>, #tpu.dimension_semantics<arbitrary>], iteration_bounds = array<i64: 2, 2, 1>, scalar_prefetch = 0 : i64, scratch_operands = 1 : i64, tpu.core_type = #tpu.core_type<tc>, window_params = [{transform_indices = @transform_0, window_bounds = array<i64: 1, 4, 256>}, {transform_indices = @transform_1, window_bounds = array<i64: 1, 4, 256>}, {transform_indices = @transform_2, window_bounds = array<i64: 1, 1, 256>}, {transform_indices = @transform_3, window_bounds = array<i64: 1, 1, 256>}]} {
    %c0_i32 = arith.constant 0 : i32
    %0 = arith.cmpi eq, %arg1, %c0_i32 : i32
    %c0_i32_0 = arith.constant 0 : i32
    %1 = arith.cmpi eq, %arg2, %c0_i32_0 : i32
    %2 = arith.andi %0, %1 : i1
    %3 = arith.extui %2 : i1 to i32
    %c0_i32_1 = arith.constant 0 : i32
    %4 = arith.cmpi ne, %3, %c0_i32_1 : i32
    scf.if %4 {
      %cst_33 = arith.constant 0.000000e+00 : f32
      %89 = vector.broadcast %cst_33 : f32 to vector<1x256xf32>
      %c0_34 = arith.constant 0 : index
      %c0_35 = arith.constant 0 : index
      %90 = vector.load %arg7[%c0_34, %c0_35] : memref<1x256xf32, #tpu.memory_space<vmem>>, vector<1x256xf32>
      tpu.vector_store %arg7[%c0_34, %c0_35], %89 {strides = array<i32>} : memref<1x256xf32, #tpu.memory_space<vmem>>, vector<1x256xf32>,
    } else {
    }
    %c0 = arith.constant 0 : index
    %c0_2 = arith.constant 0 : index
    %c0_3 = arith.constant 0 : index
    %5 = vector.load %arg3[%c0, %c0_2, %c0_3] : memref<1x4x256xf32, #tpu.memory_space<vmem>>, vector<1x4x256xf32>
    %6 = vector.shape_cast %5 : vector<1x4x256xf32> to vector<4x256xf32>
    %c0_4 = arith.constant 0 : index
    %c0_5 = arith.constant 0 : index
    %c0_6 = arith.constant 0 : index
    %7 = vector.load %arg4[%c0_4, %c0_5, %c0_6] : memref<1x4x256xf32, #tpu.memory_space<vmem>>, vector<1x4x256xf32>
    %8 = vector.shape_cast %7 : vector<1x4x256xf32> to vector<4x256xf32>
    %c0_7 = arith.constant 0 : index
    %c0_8 = arith.constant 0 : index
    %c0_9 = arith.constant 0 : index
    %9 = vector.load %arg5[%c0_7, %c0_8, %c0_9] : memref<1x1x256xi32, #tpu.memory_space<vmem>>, vector<1x1x256xi32>
    %10 = vector.shape_cast %9 : vector<1x1x256xi32> to vector<1x256xi32>
    %cst = arith.constant dense<0xFF800000> : vector<256xf32>
    %11 = vector.multi_reduction <maximumf>, %6, %cst [0] : vector<4x256xf32> to vector<256xf32>
    %12 = vector.shape_cast %11 : vector<256xf32> to vector<1x256xf32>
    %13 = vector.broadcast %12 : vector<1x256xf32> to vector<4x256xf32>
    %14 = arith.subf %6, %13 : vector<4x256xf32>
    %15 = math.exp %14 : vector<4x256xf32>
    %cst_10 = arith.constant dense<0.000000e+00> : vector<256xf32>
    %16 = vector.multi_reduction <add>, %15, %cst_10 [0] : vector<4x256xf32> to vector<256xf32>
    %17 = vector.shape_cast %16 : vector<256xf32> to vector<1x256xf32>
    %18 = math.log %17 : vector<1x256xf32>
    %19 = vector.broadcast %18 : vector<1x256xf32> to vector<4x256xf32>
    %20 = arith.subf %14, %19 : vector<4x256xf32>
    %21 = vector.broadcast %17 : vector<1x256xf32> to vector<4x256xf32>
    %22 = arith.divf %15, %21 : vector<4x256xf32>
    %cst_11 = arith.constant dense<0xFF800000> : vector<256xf32>
    %23 = vector.multi_reduction <maximumf>, %8, %cst_11 [0] : vector<4x256xf32> to vector<256xf32>
    %24 = vector.shape_cast %23 : vector<256xf32> to vector<1x256xf32>
    %25 = vector.broadcast %24 : vector<1x256xf32> to vector<4x256xf32>
    %26 = arith.subf %8, %25 : vector<4x256xf32>
    %27 = math.exp %26 : vector<4x256xf32>
    %cst_12 = arith.constant dense<0.000000e+00> : vector<256xf32>
    %28 = vector.multi_reduction <add>, %27, %cst_12 [0] : vector<4x256xf32> to vector<256xf32>
    %29 = vector.shape_cast %28 : vector<256xf32> to vector<1x256xf32>
    %30 = math.log %29 : vector<1x256xf32>
    %31 = vector.broadcast %30 : vector<1x256xf32> to vector<4x256xf32>
    %32 = arith.subf %26, %31 : vector<4x256xf32>
    %33 = vector.broadcast %29 : vector<1x256xf32> to vector<4x256xf32>
    %34 = arith.divf %27, %33 : vector<4x256xf32>
    %35 = tpu.iota {dimensions = array<i32: 0>} : vector<4x256xi32>
    %36 = vector.broadcast %10 : vector<1x256xi32> to vector<4x256xi32>
    %37 = arith.cmpi eq, %35, %36 : vector<4x256xi32>
    %38 = arith.extui %37 : vector<4x256xi1> to vector<4x256xi32>
    %39 = arith.sitofp %38 : vector<4x256xi32> to vector<4x256xf32>
    %40 = arith.mulf %39, %20 : vector<4x256xf32>
    %cst_13 = arith.constant dense<0.000000e+00> : vector<256xf32>
    %41 = vector.multi_reduction <add>, %40, %cst_13 [0] : vector<4x256xf32> to vector<256xf32>
    %42 = vector.shape_cast %41 : vector<256xf32> to vector<1x256xf32>
    %cst_14 = arith.constant 0.000000e+00 : f32
    %43 = vector.broadcast %cst_14 : f32 to vector<1x256xf32>
    %44 = arith.subf %43, %42 : vector<1x256xf32>
    %cst_15 = arith.constant 1.000000e-07 : f32
    %cst_16 = arith.constant 1.000000e+00 : f32
    %45 = vector.broadcast %cst_15 : f32 to vector<4x256xf32>
    %46 = arith.maximumf %45, %22 : vector<4x256xf32>
    %47 = vector.broadcast %cst_16 : f32 to vector<4x256xf32>
    %48 = arith.minimumf %47, %46 : vector<4x256xf32>
    %cst_17 = arith.constant dense<0.000000e+00> : vector<256xf32>
    %49 = vector.multi_reduction <add>, %48, %cst_17 [0] : vector<4x256xf32> to vector<256xf32>
    %50 = vector.shape_cast %49 : vector<256xf32> to vector<1x256xf32>
    %51 = arith.mulf %39, %48 : vector<4x256xf32>
    %cst_18 = arith.constant dense<0.000000e+00> : vector<256xf32>
    %52 = vector.multi_reduction <add>, %51, %cst_18 [0] : vector<4x256xf32> to vector<256xf32>
    %53 = vector.shape_cast %52 : vector<256xf32> to vector<1x256xf32>
    %54 = arith.subf %50, %53 : vector<1x256xf32>
    %cst_19 = arith.constant 2.30258512 : f32
    %55 = vector.broadcast %cst_19 : f32 to vector<1x256xf32>
    %56 = arith.mulf %55, %54 : vector<1x256xf32>
    %cst_20 = arith.constant 1.000000e-01 : f32
    %57 = vector.broadcast %cst_20 : f32 to vector<1x256xf32>
    %58 = arith.mulf %57, %44 : vector<1x256xf32>
    %cst_21 = arith.constant 1.000000e+00 : f32
    %59 = vector.broadcast %cst_21 : f32 to vector<1x256xf32>
    %60 = arith.mulf %59, %56 : vector<1x256xf32>
    %61 = arith.addf %58, %60 : vector<1x256xf32>
    %62 = arith.subf %32, %20 : vector<4x256xf32>
    %63 = arith.mulf %34, %62 : vector<4x256xf32>
    %cst_22 = arith.constant dense<0.000000e+00> : vector<256xf32>
    %64 = vector.multi_reduction <add>, %63, %cst_22 [0] : vector<4x256xf32> to vector<256xf32>
    %65 = vector.shape_cast %64 : vector<256xf32> to vector<1x256xf32>
    %cst_23 = arith.constant 0.000000e+00 : f32
    %66 = vector.broadcast %cst_23 : f32 to vector<1x256xf32>
    %67 = arith.subf %66, %65 : vector<1x256xf32>
    %68 = math.exp %67 : vector<1x256xf32>
    %69 = arith.mulf %61, %68 : vector<1x256xf32>
    %70 = arith.addf %69, %65 : vector<1x256xf32>
    %c1_i32 = arith.constant 1 : i32
    %71 = arith.muli %arg0, %c1_i32 : i32
    %72 = arith.addi %71, %arg2 : i32
    %73 = tpu.iota {dimensions = array<i32: 1>} : vector<1x256xi32>
    %c256_i32 = arith.constant 256 : i32
    %74 = arith.muli %72, %c256_i32 : i32
    %75 = vector.broadcast %74 : i32 to vector<1x256xi32>
    %76 = arith.addi %75, %73 : vector<1x256xi32>
    %c256_i32_24 = arith.constant 256 : i32
    %77 = vector.broadcast %c256_i32_24 : i32 to vector<1x256xi32>
    %78 = arith.cmpi slt, %76, %77 : vector<1x256xi32>
    %c0_25 = arith.constant 0 : index
    %c0_26 = arith.constant 0 : index
    %79 = vector.load %arg7[%c0_25, %c0_26] : memref<1x256xf32, #tpu.memory_space<vmem>>, vector<1x256xf32>
    %cst_27 = arith.constant 0.000000e+00 : f32
    %80 = vector.broadcast %cst_27 : f32 to vector<1x256xf32>
    %81 = arith.select %78, %70, %80 : vector<1x256xi1>, vector<1x256xf32>
    %82 = arith.addf %79, %81 : vector<1x256xf32>
    %c0_28 = arith.constant 0 : index
    %c0_29 = arith.constant 0 : index
    %83 = vector.load %arg7[%c0_28, %c0_29] : memref<1x256xf32, #tpu.memory_space<vmem>>, vector<1x256xf32>
    tpu.vector_store %arg7[%c0_28, %c0_29], %82 {strides = array<i32>} : memref<1x256xf32, #tpu.memory_space<vmem>>, vector<1x256xf32>,
    %c1_i32_30 = arith.constant 1 : i32
    %84 = arith.cmpi eq, %arg1, %c1_i32_30 : i32
    %c0_i32_31 = arith.constant 0 : i32
    %85 = arith.cmpi eq, %arg2, %c0_i32_31 : i32
    %86 = arith.andi %84, %85 : i1
    %87 = arith.extui %86 : i1 to i32
    %c0_i32_32 = arith.constant 0 : i32
    %88 = arith.cmpi ne, %87, %c0_i32_32 : i32
    scf.if %88 {
      %c0_33 = arith.constant 0 : index
      %c0_34 = arith.constant 0 : index
      %89 = vector.load %arg7[%c0_33, %c0_34] : memref<1x256xf32, #tpu.memory_space<vmem>>, vector<1x256xf32>
      %c0_35 = arith.constant 0 : index
      %c0_36 = arith.constant 0 : index
      %c0_37 = arith.constant 0 : index
      %90 = vector.load %arg6[%c0_35, %c0_36, %c0_37] : memref<1x1x256xf32, #tpu.memory_space<vmem>>, vector<1x1x256xf32>
      %91 = vector.shape_cast %90 : vector<1x1x256xf32> to vector<1x256xf32>
      %92 = vector.shape_cast %89 : vector<1x256xf32> to vector<1x1x256xf32>
      tpu.vector_store %arg6[%c0_35, %c0_36, %c0_37], %92 {strides = array<i32>} : memref<1x1x256xf32, #tpu.memory_space<vmem>>, vector<1x1x256xf32>,
    } else {
    }
    return
  }
  func.func @transform_0(%arg0: i32, %arg1: i32, %arg2: i32) -> (i32, i32, i32) {
    %c1_i32 = arith.constant 1 : i32
    %0 = arith.muli %arg0, %c1_i32 : i32
    %1 = arith.addi %0, %arg2 : i32
    %c0_i32 = arith.constant 0 : i32
    %2 = arith.minsi %1, %c0_i32 : i32
    %c0_i32_0 = arith.constant 0 : i32
    %c0_i32_1 = arith.constant 0 : i32
    return %arg1, %c0_i32_0, %2 : i32, i32, i32
  }
  func.func @transform_1(%arg0: i32, %arg1: i32, %arg2: i32) -> (i32, i32, i32) {
    %c1_i32 = arith.constant 1 : i32
    %0 = arith.muli %arg0, %c1_i32 : i32
    %1 = arith.addi %0, %arg2 : i32
    %c0_i32 = arith.constant 0 : i32
    %2 = arith.minsi %1, %c0_i32 : i32
    %c0_i32_0 = arith.constant 0 : i32
    %c0_i32_1 = arith.constant 0 : i32
    return %arg1, %c0_i32_0, %2 : i32, i32, i32
  }
  func.func @transform_2(%arg0: i32, %arg1: i32, %arg2: i32) -> (i32, i32, i32) {
    %c1_i32 = arith.constant 1 : i32
    %0 = arith.muli %arg0, %c1_i32 : i32
    %1 = arith.addi %0, %arg2 : i32
    %c0_i32 = arith.constant 0 : i32
    %2 = arith.minsi %1, %c0_i32 : i32
    %c0_i32_0 = arith.constant 0 : i32
    %c0_i32_1 = arith.constant 0 : i32
    return %arg1, %c0_i32_0, %2 : i32, i32, i32
  }
  func.func @transform_3(%arg0: i32, %arg1: i32, %arg2: i32) -> (i32, i32, i32) {
    %c0_i32 = arith.constant 0 : i32
    %c0_i32_0 = arith.constant 0 : i32
    %c0_i32_1 = arith.constant 0 : i32
    return %arg0, %c0_i32, %c0_i32_0 : i32, i32, i32
  }
}

</mosaic_0001>

<llo_original>
// kernel: tpu_custom_call.1
$region0: #{tpu_custom_call.1}
  #allocation0 [shape = 'u32[]', space=smem, size = 0x4, offset = 0x4, fixed_abs, tag = 'smem constant byte address 0x4 - core index']
  #allocation1 [shape = 'u32[144,128]{1,0:T(1,128)}', space=vmem, size = 0x12000, scoped, tag = 'internal scratch']
  #allocation2 [shape = 'f32[1,256]{1,0:T(1,128)}', space=vmem, size = 0x400, scoped, tag = 'scratch operand']
  %s0 = inlined_call_operand.hbm [shape: f32[2,4,256], index: 0, kind: input, shape index: {}]
  %s1 = inlined_call_operand.hbm [shape: f32[2,4,256], index: 1, kind: input, shape index: {}]
  %s2 = inlined_call_operand.vmem [shape: s32[2,1,256], index: 2, kind: input, shape index: {}]
  %s3 = inlined_call_operand.hbm [shape: f32[2,1,256], index: 3, kind: output, shape index: {}]
  %s4 = sld [smem:[#allocation0]]
  $region61: #{tpu_custom_call.1} parent=0
    _
  %s6 = ssub.s32 1, %s4
  %s7 = scalar_select 0, %s6, %s4
  $region1: #{tpu_custom_call.1} parent=0
    #allocation3 [shape = 'u8[8192]{0}', space=vmem, size = 0x2000, scoped, tag = 'input window, operand 0']
    #allocation4 [shape = 's32[2]{0}', space=sflag, size = 0x8, scoped, tag = 'scoped memory for tpu_custom_call.1']
    #allocation5 [shape = 's32[2]{0}', space=sflag, size = 0x8, scoped, tag = 'scoped memory for tpu_custom_call.1']
    #allocation6 [shape = 'u8[8192]{0}', space=vmem, size = 0x2000, scoped, tag = 'input window, operand 1']
    #allocation7 [shape = 's32[2]{0}', space=sflag, size = 0x8, scoped, tag = 'scoped memory for tpu_custom_call.1']
    #allocation8 [shape = 'u8[2048]{0}', space=vmem, size = 0x800, scoped, tag = 'output window, operand 0']
    %8 = vsyncpa [#allocation4], 0
    %s9 = scalar_lea.sflag [#allocation4], 1
    %10 = vsyncpa %s9, 0
    %11 = vsyncpa [#allocation7], 0
    %s12 = scalar_lea.sflag [#allocation7], 1
    %13 = vsyncpa %s12, 0
    %14 = vsyncpa [#allocation5], 0
    %s15 = scalar_lea.sflag [#allocation5], 1
    %16 = vsyncpa %s15, 0
    loop: start=0, step=1, limit=6
    $region2: #{tpu_custom_call.1} parent=1 // loop_pre_header
      _
    $region3: #{tpu_custom_call.1} parent=1 // loop_header
      %s18 = sphi 0, %s22
      %p19 = scmp.ge.s32.totalorder %s18, 6
      %s25 = sphi 0, %s44
      %s26 = sphi 0, %s40
      %s27 = sphi 0, %s36
      %s28 = sphi 0, %s25
      %s29 = sphi 0, %s26
      %s30 = sphi 0, %s27
      %s31 = sphi 0, %s28
      %s32 = sphi 0, %s29
      %s33 = sphi 0, %s30
      %s55 = sphi 0, %s57
      %s58 = sphi 0, %s55
      %s59 = sphi 0, %s58
      %s75 = sphi 0, %s59
      %s89 = sphi 0, %s91
      %s92 = sphi 0, %s89
      %s93 = sphi 0, %s92
      %s109 = sphi 0, %s93
      %s123 = sphi 0, %s125
      %s126 = sphi 0, %s123
      %s127 = sphi 0, %s126
      %s143 = sphi 0, %s127
      %s149 = sphi 0, %s151
      %s152 = sphi 0, %s149
      %s153 = sphi 0, %s152
      %s169 = sphi 0, %s153
    $region4: #{tpu_custom_call.1} parent=1 // loop_header_branch
      %21 = sbr.rel (%p19) target = $region8
    $region5: #{tpu_custom_call.1} parent=1 // loop_body
      %s23 = ssub.s32 %s18, 1
      %s24 = ssub.s32 %s18, 2
      %s34 = sadd.s32 1, %s27
      %p35 = scmp.ge.s32.totalorder %s34, 1
      %s36 = scalar_select %p35, 0, %s34
      %s37 = sadd.s32 1, %s26
      %s38 = scalar_select %p35, %s37, %s26
      %p39 = scmp.ge.s32.totalorder %s38, 2
      %s40 = scalar_select %p39, 0, %s38
      %s41 = sadd.s32 1, %s25
      %s42 = scalar_select %p39, %s41, %s25
      %p43 = scmp.ge.s32.totalorder %s42, 2
      %s44 = scalar_select %p43, 0, %s42
      %s45 = sadd.s32 %s25, %s27
      %p46 = scmp.lt.s32.totalorder %s45, 0
      %s47 = scalar_select %p46, %s45, 0
      %s48 = sadd.s32 %s44, %s36
      %p49 = scmp.lt.s32.totalorder %s48, 0
      %s50 = scalar_select %p49, %s48, 0
      %s51 = ssub.s32 %s26, %s40
      %s52 = ssub.s32 %s47, %s50
      %s53 = sor.u32 %s51, %s52
      %p54 = scmp.eq.s32.totalorder %s53, 0
      %s56 = sadd.s32 %s55, 1
      %s57 = scalar_select %p54, %s55, %s56
      %p60 = pneg %p54
      %p61 = scmp.eq.s32.totalorder %s18, 3
      %p62 = por %p60, %p61
      %p63 = scmp.ne.s32.totalorder %s55, %s58
      %p64 = scmp.eq.s32.totalorder %s18, 0
      %p65 = por %p63, %p64
      %p66 = scmp.ne.s32.totalorder %s55, %s58
      %p67 = scmp.eq.s32.totalorder %s23, 3
      %p68 = por %p66, %p67
      %p69 = scmp.ne.s32.totalorder %s58, %s59
      %p70 = scmp.eq.s32.totalorder %s23, 0
      %p71 = por %p69, %p70
      %p72 = scmp.ne.s32.totalorder %s58, %s59
      %p73 = scmp.eq.s32.totalorder %s24, 3
      %p74 = por %p72, %p73
      %p76 = scmp.ne.s32.totalorder %s59, %s75
      %p77 = scmp.eq.s32.totalorder %s24, 0
      %p78 = por %p76, %p77
      %s79 = sadd.s32 %s25, %s27
      %p80 = scmp.lt.s32.totalorder %s79, 0
      %s81 = scalar_select %p80, %s79, 0
      %s82 = sadd.s32 %s44, %s36
      %p83 = scmp.lt.s32.totalorder %s82, 0
      %s84 = scalar_select %p83, %s82, 0
      %s85 = ssub.s32 %s26, %s40
      %s86 = ssub.s32 %s81, %s84
      %s87 = sor.u32 %s85, %s86
      %p88 = scmp.eq.s32.totalorder %s87, 0
      %s90 = sadd.s32 %s89, 1
      %s91 = scalar_select %p88, %s89, %s90
      %p94 = pneg %p88
      %p95 = scmp.eq.s32.totalorder %s18, 3
      %p96 = por %p94, %p95
      %p97 = scmp.ne.s32.totalorder %s89, %s92
      %p98 = scmp.eq.s32.totalorder %s18, 0
      %p99 = por %p97, %p98
      %p100 = scmp.ne.s32.totalorder %s89, %s92
      %p101 = scmp.eq.s32.totalorder %s23, 3
      %p102 = por %p100, %p101
      %p103 = scmp.ne.s32.totalorder %s92, %s93
      %p104 = scmp.eq.s32.totalorder %s23, 0
      %p105 = por %p103, %p104
      %p106 = scmp.ne.s32.totalorder %s92, %s93
      %p107 = scmp.eq.s32.totalorder %s24, 3
      %p108 = por %p106, %p107
      %p110 = scmp.ne.s32.totalorder %s93, %s109
      %p111 = scmp.eq.s32.totalorder %s24, 0
      %p112 = por %p110, %p111
      %s113 = sadd.s32 %s25, %s27
      %p114 = scmp.lt.s32.totalorder %s113, 0
      %s115 = scalar_select %p114, %s113, 0
      %s116 = sadd.s32 %s44, %s36
      %p117 = scmp.lt.s32.totalorder %s116, 0
      %s118 = scalar_select %p117, %s116, 0
      %s119 = ssub.s32 %s26, %s40
      %s120 = ssub.s32 %s115, %s118
      %s121 = sor.u32 %s119, %s120
      %p122 = scmp.eq.s32.totalorder %s121, 0
      %s124 = sadd.s32 %s123, 1
      %s125 = scalar_select %p122, %s123, %s124
      %p128 = pneg %p122
      %p129 = scmp.eq.s32.totalorder %s18, 3
      %p130 = por %p128, %p129
      %p131 = scmp.ne.s32.totalorder %s123, %s126
      %p132 = scmp.eq.s32.totalorder %s18, 0
      %p133 = por %p131, %p132
      %p134 = scmp.ne.s32.totalorder %s123, %s126
      %p135 = scmp.eq.s32.totalorder %s23, 3
      %p136 = por %p134, %p135
      %p137 = scmp.ne.s32.totalorder %s126, %s127
      %p138 = scmp.eq.s32.totalorder %s23, 0
      %p139 = por %p137, %p138
      %p140 = scmp.ne.s32.totalorder %s126, %s127
      %p141 = scmp.eq.s32.totalorder %s24, 3
      %p142 = por %p140, %p141
      %p144 = scmp.ne.s32.totalorder %s127, %s143
      %p145 = scmp.eq.s32.totalorder %s24, 0
      %p146 = por %p144, %p145
      %s147 = ssub.s32 %s25, %s44
      %p148 = scmp.eq.s32.totalorder %s147, 0
      %s150 = sadd.s32 %s149, 1
      %s151 = scalar_select %p148, %s149, %s150
      %p154 = pneg %p148
      %p155 = scmp.eq.s32.totalorder %s18, 3
      %p156 = por %p154, %p155
      %p157 = scmp.ne.s32.totalorder %s149, %s152
      %p158 = scmp.eq.s32.totalorder %s18, 0
      %p159 = por %p157, %p158
      %p160 = scmp.ne.s32.totalorder %s149, %s152
      %p161 = scmp.eq.s32.totalorder %s23, 3
      %p162 = por %p160, %p161
      %p163 = scmp.ne.s32.totalorder %s152, %s153
      %p164 = scmp.eq.s32.totalorder %s23, 0
      %p165 = por %p163, %p164
      %p166 = scmp.ne.s32.totalorder %s152, %s153
      %p167 = scmp.eq.s32.totalorder %s24, 3
      %p168 = por %p166, %p167
      %p170 = scmp.ne.s32.totalorder %s153, %s169
      %p171 = scmp.eq.s32.totalorder %s24, 0
      %p172 = por %p170, %p171
      %p173 = scmp.le.s32.totalorder 1, %s18
      %p174 = scmp.lt.s32.totalorder %s18, 5
      %p175 = pnand %p173, %p174
      %p176 = pneg %p175
      // Predicated region
      $region9: #{tpu_custom_call.1} parent=5 // pred_check
        _
      $region10: #{tpu_custom_call.1} parent=5 // pred_check_branch
        %178 = sbr.rel (%p175) target = $region12
      $region11: #{tpu_custom_call.1} parent=5 // pred_region
        %s179 = ssub.s32 %s18, 1
      $region12: #{tpu_custom_call.1} parent=5 // pred_fallthru
        _
      %p180 = scmp.lt.s32.totalorder %s18, 4
      // Predicated region
      $region13: #{tpu_custom_call.1} parent=5 // pred_check
        %p181 = pneg %p180
      $region14: #{tpu_custom_call.1} parent=5 // pred_check_branch
        %183 = sbr.rel (%p181) target = $region16
      $region15: #{tpu_custom_call.1} parent=5 // pred_region
        // Predicated region
        $region17: #{tpu_custom_call.1} parent=15 // pred_check
          %p184 = pneg %p65
        $region18: #{tpu_custom_call.1} parent=15 // pred_check_branch
          %186 = sbr.rel (%p184) target = $region20
        $region19: #{tpu_custom_call.1} parent=15 // pred_region
          %s187 = sand.u32 %s55, 1
          %s188 = scalar_lea.sflag [#allocation4], %s187
          %s189 = sand.u32 %s55, 1
          %s190 = smul.addr %s189, 8
          %s191 = scalar_lea.vmem [#allocation3], %s190
          %s192 = sadd.s32 %s25, %s27
          %p193 = scmp.lt.s32.totalorder %s192, 0
          %s194 = scalar_select %p193, %s192, 0
          %s195 = smul.u32 2, %s194
          %s197 = ssub.s32 128, 128
          %198 = vsyncadd %s188, %s197
          %s199 = smul.addr %s26, 2
          %s200 = sadd.s32 %s195, %s199
          %s201 = smul.addr %s200, 64
          %s202 = scalar_lea.hbm %s0, %s201
          %s204 = sshll.u32 %s191, 4
          %s205 = int_to_ptr.vmem [resolvable:$true] %s204
          %207 = dma.hbm_to_vmem [thread:$0]  %s202, 128, %s205, %s188
        $region20: #{tpu_custom_call.1} parent=15 // pred_fallthru
          _
        // Predicated region
        $region21: #{tpu_custom_call.1} parent=15 // pred_check
          %p208 = pneg %p99
        $region22: #{tpu_custom_call.1} parent=15 // pred_check_branch
          %210 = sbr.rel (%p208) target = $region24
        $region23: #{tpu_custom_call.1} parent=15 // pred_region
          %s211 = sand.u32 %s89, 1
          %s212 = scalar_lea.sflag [#allocation7], %s211
          %s213 = sand.u32 %s89, 1
          %s214 = smul.addr %s213, 8
          %s215 = scalar_lea.vmem [#allocation6], %s214
          %s216 = sadd.s32 %s25, %s27
          %p217 = scmp.lt.s32.totalorder %s216, 0
          %s218 = scalar_select %p217, %s216, 0
          %s219 = smul.u32 2, %s218
          %s221 = ssub.s32 128, 128
          %222 = vsyncadd %s212, %s221
          %s223 = smul.addr %s26, 2
          %s224 = sadd.s32 %s219, %s223
          %s225 = smul.addr %s224, 64
          %s226 = scalar_lea.hbm %s1, %s225
          %s228 = sshll.u32 %s215, 4
          %s229 = int_to_ptr.vmem [resolvable:$true] %s228
          %231 = dma.hbm_to_vmem [thread:$0]  %s226, 128, %s229, %s212
        $region24: #{tpu_custom_call.1} parent=15 // pred_fallthru
          _
        // Predicated region
        $region25: #{tpu_custom_call.1} parent=15 // pred_check
          %p232 = pneg %p133
        $region26: #{tpu_custom_call.1} parent=15 // pred_check_branch
          %234 = sbr.rel (%p232) target = $region28
        $region27: #{tpu_custom_call.1} parent=15 // pred_region
          %s235 = sadd.s32 %s25, %s27
          %p236 = scmp.lt.s32.totalorder %s235, 0
          %s237 = scalar_select %p236, %s235, 0
          %s238 = smul.u32 2, %s237
          %p239 = scmp.lt.s32.totalorder %s26, 1
          %s240 = scalar_select %p239, %s26, 1
          %p241 = scmp.lt.s32.totalorder %s238, 1
          %s242 = scalar_select %p241, %s238, 1
          %s243 = smul.addr %s240, 2
          %s244 = sadd.s32 %s242, %s243
          %s245 = scalar_lea.vmem %s2, %s244
          %s246 = sadd.s32 %s25, %s27
          %p247 = scmp.lt.s32.totalorder %s246, 0
          %s248 = scalar_select %p247, %s246, 0
          %s249 = smul.u32 2, %s248
        $region28: #{tpu_custom_call.1} parent=15 // pred_fallthru
          _
      $region16: #{tpu_custom_call.1} parent=5 // pred_fallthru
        _
      %p250 = scmp.le.s32.totalorder 1, %s18
      %p251 = scmp.lt.s32.totalorder %s18, 5
      %p252 = pnand %p250, %p251
      %p253 = pneg %p252
      // Predicated region
      $region29: #{tpu_custom_call.1} parent=5 // pred_check
        _
      $region30: #{tpu_custom_call.1} parent=5 // pred_check_branch
        %255 = sbr.rel (%p252) target = $region32
      $region31: #{tpu_custom_call.1} parent=5 // pred_region
        %s256 = ssub.s32 %s18, 1
        %s257 = sand.u32 %s58, 1
        %s258 = scalar_lea.sflag [#allocation4], %s257
        %s259 = sand.u32 %s58, 1
        %s260 = smul.addr %s259, 8
        %s261 = scalar_lea.vmem [#allocation3], %s260
        // Predicated region
        $region33: #{tpu_custom_call.1} parent=31 // pred_check
          %p262 = pneg %p71
        $region34: #{tpu_custom_call.1} parent=31 // pred_check_branch
          %264 = sbr.rel (%p262) target = $region36
        $region35: #{tpu_custom_call.1} parent=31 // pred_region
          %265 = dma.done %s258, 128
        $region36: #{tpu_custom_call.1} parent=31 // pred_fallthru
          _
        %s266 = sand.u32 %s92, 1
        %s267 = scalar_lea.sflag [#allocation7], %s266
        %s268 = sand.u32 %s92, 1
        %s269 = smul.addr %s268, 8
        %s270 = scalar_lea.vmem [#allocation6], %s269
        // Predicated region
        $region37: #{tpu_custom_call.1} parent=31 // pred_check
          %p271 = pneg %p105
        $region38: #{tpu_custom_call.1} parent=31 // pred_check_branch
          %273 = sbr.rel (%p271) target = $region40
        $region39: #{tpu_custom_call.1} parent=31 // pred_region
          %274 = dma.done %s267, 128
        $region40: #{tpu_custom_call.1} parent=31 // pred_fallthru
          _
        %s275 = sand.u32 %s58, 1
        %s276 = scalar_lea.sflag [#allocation4], %s275
        %s277 = sand.u32 %s58, 1
        %s278 = smul.addr %s277, 8
        %s279 = scalar_lea.vmem [#allocation3], %s278
        %p280 = pneg %p71
        %p281 = pneg %p68
        %s282 = sand.u32 %s92, 1
        %s283 = scalar_lea.sflag [#allocation7], %s282
        %s284 = sand.u32 %s92, 1
        %s285 = smul.addr %s284, 8
        %s286 = scalar_lea.vmem [#allocation6], %s285
        %p287 = pneg %p105
        %p288 = pneg %p102
        %s289 = sadd.s32 %s28, %s30
        %p290 = scmp.lt.s32.totalorder %s289, 0
        %s291 = scalar_select %p290, %s289, 0
        %s292 = smul.u32 2, %s291
        %p293 = scmp.lt.s32.totalorder %s29, 1
        %s294 = scalar_select %p293, %s29, 1
        %p295 = scmp.lt.s32.totalorder %s292, 1
        %s296 = scalar_select %p295, %s292, 1
        %s297 = smul.addr %s294, 2
        %s298 = sadd.s32 %s296, %s297
        %s299 = scalar_lea.vmem %s2, %s298
        %p300 = pneg %p139
        %p301 = pneg %p136
        %p302 = pneg %p165
        %p303 = pneg %p162
        %s304 = sand.u32 %s152, 1
        %s305 = scalar_lea.sflag [#allocation5], %s304
        %s306 = sand.u32 %s152, 1
        %s307 = smul.addr %s306, 2
        %s308 = scalar_lea.vmem [#allocation8], %s307
        %s309 = sadd.s32 %s28, %s30
        %p310 = scmp.lt.s32.totalorder %s309, 0
        %s311 = scalar_select %p310, %s309, 0
        %s312 = smul.u32 2, %s311
        %s313 = sadd.s32 %s28, %s30
        %p314 = scmp.lt.s32.totalorder %s313, 0
        %s315 = scalar_select %p314, %s313, 0
        %s316 = smul.u32 2, %s315
        %s317 = sadd.s32 %s28, %s30
        %p318 = scmp.lt.s32.totalorder %s317, 0
        %s319 = scalar_select %p318, %s317, 0
        %s320 = smul.u32 2, %s319
        %p321 = scmp.lt.s32.totalorder %s29, 1
        %s322 = scalar_select %p321, %s29, 1
        %p323 = scmp.lt.s32.totalorder %s320, 1
        %s324 = scalar_select %p323, %s320, 1
        %s325 = smul.addr %s322, 2
        %s326 = sadd.s32 %s324, %s325
        %s327 = scalar_lea.vmem %s2, %s326
        %s328 = sadd.s32 %s28, %s30
        %p329 = scmp.lt.s32.totalorder %s328, 0
        %s330 = scalar_select %p329, %s328, 0
        %s331 = smul.u32 2, %s330
        %p332 = scmp.eq.s32.totalorder %s29, 0
        %p333 = scmp.eq.s32.totalorder %s30, 0
        %p334 = pnand %p332, %p333
        %p335 = pneg %p334
        // Predicated region
        $region41: #{tpu_custom_call.1} parent=31 // pred_check
          _
        $region42: #{tpu_custom_call.1} parent=31 // pred_check_branch
          %337 = sbr.rel (%p334) target = $region44
        $region43: #{tpu_custom_call.1} parent=31 // pred_region
          %v338 = vlaneseq
          %vm339 = vcmp.ge.s32.totalorder %v338, 0
          %vm340 = vcmp.lt.s32.totalorder %v338, 256
          %vm341 = vmand %vm339, %vm340
          %342 = vst.msk [vmem:[#allocation2] sm:$0x3] %vm341, 0.0
        $region44: #{tpu_custom_call.1} parent=31 // pred_fallthru
          _
        %v343 = vld [vmem:[%s261] sm:$0xff]
        %v344 = vld [vmem:[%s270] sm:$0xff]
        %v345 = vld [vmem:[%s327] sm:$0x3]
        %v347 = vcombine.high %v343, %v343
        %vm349 = vcmask 1043456
        %v350 = vsel %vm349, %v343, -inf
        %v351 = vrot.slane %v350, 4
        %v352 = vmax.f32 %v350, %v351
        %v353 = vrot.slane %v352, 2
        %v354 = vmax.f32 %v352, %v353
        %v355 = vrot.slane %v354, 1
        %v356 = vmax.f32 %v354, %v355
        %v357 = vsel %vm349, %v347, -inf
        %v358 = vrot.slane %v357, 4
        %v359 = vmax.f32 %v357, %v358
        %v360 = vrot.slane %v359, 2
        %v361 = vmax.f32 %v359, %v360
        %v362 = vrot.slane %v361, 1
        %v363 = vmax.f32 %v361, %v362
        %v366 = vcombine.low %v356, %v363
        %v368 = vsub.f32 %v343, %v366
        %v369 = vmul.f32 %v368, 1.442695
        %v370 = vpow.pop %v369
        %v372 = vcombine.high %v370, %v370
        %v374 = vsel %vm349, %v370, 0.0
        %v375 = vrot.slane %v374, 4
        %v376 = vadd.f32 %v374, %v375
        %v377 = vrot.slane %v376, 2
        %v378 = vadd.f32 %v376, %v377
        %v379 = vrot.slane %v378, 1
        %v380 = vadd.f32 %v378, %v379
        %v381 = vsel %vm349, %v372, 0.0
        %v382 = vrot.slane %v381, 4
        %v383 = vadd.f32 %v381, %v382
        %v384 = vrot.slane %v383, 2
        %v385 = vadd.f32 %v383, %v384
        %v386 = vrot.slane %v385, 1
        %v387 = vadd.f32 %v385, %v386
        %v388 = vlog2.pop %v380
        %v389 = vmul.f32 %v388, 0.6931472
        %v390 = vlog2.pop %v387
        %v391 = vmul.f32 %v390, 0.6931472
        %v394 = vcombine.low %v389, %v391
        %v396 = vsub.f32 %v368, %v394
        %v399 = vcombine.low %v380, %v387
        %v401 = vrcp.pop %v399
        %v402 = vmul.f32 %v370, %v401
        %v404 = vcombine.high %v344, %v344
        %v406 = vsel %vm349, %v344, -inf
        %v407 = vrot.slane %v406, 4
        %v408 = vmax.f32 %v406, %v407
        %v409 = vrot.slane %v408, 2
        %v410 = vmax.f32 %v408, %v409
        %v411 = vrot.slane %v410, 1
        %v412 = vmax.f32 %v410, %v411
        %v413 = vsel %vm349, %v404, -inf
        %v414 = vrot.slane %v413, 4
        %v415 = vmax.f32 %v413, %v414
        %v416 = vrot.slane %v415, 2
        %v417 = vmax.f32 %v415, %v416
        %v418 = vrot.slane %v417, 1
        %v419 = vmax.f32 %v417, %v418
        %v422 = vcombine.low %v412, %v419
        %v424 = vsub.f32 %v344, %v422
        %v425 = vmul.f32 %v424, 1.442695
        %v426 = vpow.pop %v425
        %v428 = vcombine.high %v426, %v426
        %v430 = vsel %vm349, %v426, 0.0
        %v431 = vrot.slane %v430, 4
        %v432 = vadd.f32 %v430, %v431
        %v433 = vrot.slane %v432, 2
        %v434 = vadd.f32 %v432, %v433
        %v435 = vrot.slane %v434, 1
        %v436 = vadd.f32 %v434, %v435
        %v437 = vsel %vm349, %v428, 0.0
        %v438 = vrot.slane %v437, 4
        %v439 = vadd.f32 %v437, %v438
        %v440 = vrot.slane %v439, 2
        %v441 = vadd.f32 %v439, %v440
        %v442 = vrot.slane %v441, 1
        %v443 = vadd.f32 %v441, %v442
        %v444 = vlog2.pop %v436
        %v445 = vmul.f32 %v444, 0.6931472
        %v446 = vlog2.pop %v443
        %v447 = vmul.f32 %v446, 0.6931472
        %v450 = vcombine.low %v445, %v447
        %v452 = vsub.f32 %v424, %v450
        %v455 = vcombine.low %v436, %v443
        %v457 = vrcp.pop %v455
        %v458 = vmul.f32 %v426, %v457
        %v459 = vlaneseq
        %v460 = vshrl.u32 %v459, 7
        %v461 = vlaneseq
        %v462 = vshrl.u32 %v461, 7
        %v463 = vsub.s32 0, %v462
        %v464 = vrot.slane %v345, %v463
        %v465 = vlaneseq
        %v466 = vshrl.u32 %v465, 7
        %v467 = vsub.s32 1, %v466
        %v468 = vrot.slane %v345, %v467
        %vm469 = vcmp.eq.s32.totalorder %v460, %v464
        %vm470 = vcmp.eq.s32.totalorder %v460, %v468
        %v471 = vsel %vm469, 1, 0
        %v472 = vsel %vm470, 1, 0
        %v473 = vcvt.s32.f32 %v471
        %v474 = vcvt.s32.f32 %v472
        %v476 = vcombine.high %v396, %v396
        %v478 = vmul.f32 %v473, %v396
        %v479 = vmul.f32 %v474, %v476
        %v480 = vsel %vm349, %v478, 0.0
        %v481 = vrot.slane %v480, 4
        %v482 = vadd.f32 %v480, %v481
        %v483 = vrot.slane %v482, 2
        %v484 = vadd.f32 %v482, %v483
        %v485 = vrot.slane %v484, 1
        %v486 = vadd.f32 %v484, %v485
        %v487 = vsel %vm349, %v479, 0.0
        %v488 = vrot.slane %v487, 4
        %v489 = vadd.f32 %v487, %v488
        %v490 = vrot.slane %v489, 2
        %v491 = vadd.f32 %v489, %v490
        %v492 = vrot.slane %v491, 1
        %v493 = vadd.f32 %v491, %v492
        %v494 = vsub.f32 0.0, %v486
        %v495 = vsub.f32 0.0, %v493
        %v496 = vmax.f32 %v402, 1e-07
        %v497 = vmin.f32 %v496, 1.0
        %v499 = vcombine.high %v497, %v497
        %v501 = vsel %vm349, %v497, 0.0
        %v502 = vrot.slane %v501, 4
        %v503 = vadd.f32 %v501, %v502
        %v504 = vrot.slane %v503, 2
        %v505 = vadd.f32 %v503, %v504
        %v506 = vrot.slane %v505, 1
        %v507 = vadd.f32 %v505, %v506
        %v508 = vsel %vm349, %v499, 0.0
        %v509 = vrot.slane %v508, 4
        %v510 = vadd.f32 %v508, %v509
        %v511 = vrot.slane %v510, 2
        %v512 = vadd.f32 %v510, %v511
        %v513 = vrot.slane %v512, 1
        %v514 = vadd.f32 %v512, %v513
        %v515 = vmul.f32 %v473, %v497
        %v516 = vmul.f32 %v474, %v499
        %v517 = vsel %vm349, %v515, 0.0
        %v518 = vrot.slane %v517, 4
        %v519 = vadd.f32 %v517, %v518
        %v520 = vrot.slane %v519, 2
        %v521 = vadd.f32 %v519, %v520
        %v522 = vrot.slane %v521, 1
        %v523 = vadd.f32 %v521, %v522
        %v524 = vsel %vm349, %v516, 0.0
        %v525 = vrot.slane %v524, 4
        %v526 = vadd.f32 %v524, %v525
        %v527 = vrot.slane %v526, 2
        %v528 = vadd.f32 %v526, %v527
        %v529 = vrot.slane %v528, 1
        %v530 = vadd.f32 %v528, %v529
        %v531 = vsub.f32 %v507, %v523
        %v532 = vsub.f32 %v514, %v530
        %v533 = vmul.f32 %v531, 2.3025851
        %v534 = vmul.f32 %v532, 2.3025851
        %v535 = vmul.f32 %v494, 0.1
        %v536 = vmul.f32 %v495, 0.1
        %v537 = vadd.f32 %v535, %v533
        %v538 = vadd.f32 %v536, %v534
        %v539 = vsub.f32 %v452, %v396
        %v540 = vmul.f32 %v458, %v539
        %v542 = vcombine.high %v540, %v540
        %v544 = vsel %vm349, %v540, 0.0
        %v545 = vrot.slane %v544, 4
        %v546 = vadd.f32 %v544, %v545
        %v547 = vrot.slane %v546, 2
        %v548 = vadd.f32 %v546, %v547
        %v549 = vrot.slane %v548, 1
        %v550 = vadd.f32 %v548, %v549
        %v551 = vsel %vm349, %v542, 0.0
        %v552 = vrot.slane %v551, 4
        %v553 = vadd.f32 %v551, %v552
        %v554 = vrot.slane %v553, 2
        %v555 = vadd.f32 %v553, %v554
        %v556 = vrot.slane %v555, 1
        %v557 = vadd.f32 %v555, %v556
        %v558 = vsub.f32 0.0, %v550
        %v559 = vsub.f32 0.0, %v557
        %v560 = vmul.f32 %v558, 1.442695
        %v561 = vpow.pop %v560
        %v562 = vmul.f32 %v559, 1.442695
        %v563 = vpow.pop %v562
        %v564 = vmul.f32 %v537, %v561
        %v565 = vmul.f32 %v538, %v563
        %v566 = vadd.f32 %v564, %v550
        %v567 = vadd.f32 %v565, %v557
        %s568 = sadd.s32 %s28, %s30
        %v569 = vlaneseq
        %v570 = vand.u32 %v569, 127
        %v571 = vadd.s32 %v570, 128
        %s572 = smul.u32 %s568, 256
        %v573 = vstv %s572
        %v574 = vadd.s32 %v573, %v570
        %v575 = vadd.s32 %v573, %v571
        %vm576 = vcmp.lt.s32.totalorder %v574, 256
        %vm577 = vcmp.lt.s32.totalorder %v575, 256
        %v578 = vld [vmem:[#allocation2] sm:$0x3]
        %v579 = vsel %vm576, %v566, 0.0
        %v580 = vsel %vm577, %v567, 0.0
        %v583 = vcombine.low %v579, %v580
        %v585 = vunpack.c.l.s4 1966171168
        %v586 = vunpack.c.0.s8 %v585
        %v587 = vlaneseq
        %v588 = vshrl.u32 %v587, 7
        %v589 = vsub.s32 %v586, %v588
        %v590 = vrot.slane %v583, %v589
        %v592 = vunpack.c.l.s4 1966171168
        %v593 = vunpack.c.0.s8 %v592
        %v594 = vlaneseq
        %v595 = vshrl.u32 %v594, 7
        %v596 = vsub.s32 %v593, %v595
        %v597 = vrot.slane %v590, %v596
        %v599 = vadd.f32 %v578, %v597
        %v600 = vlaneseq
        %vm601 = vcmp.ge.s32.totalorder %v600, 0
        %vm602 = vcmp.lt.s32.totalorder %v600, 256
        %vm603 = vmand %vm601, %vm602
        %604 = vst.msk [vmem:[#allocation2] sm:$0x3] %vm603, %v599
        %p605 = scmp.eq.s32.totalorder %s29, 1
        %p606 = pnand %p605, %p333
        %p607 = pneg %p606
        // Predicated region
        $region45: #{tpu_custom_call.1} parent=31 // pred_check
          _
        $region46: #{tpu_custom_call.1} parent=31 // pred_check_branch
          %609 = sbr.rel (%p606) target = $region48
        $region47: #{tpu_custom_call.1} parent=31 // pred_region
          %v610 = vld [vmem:[#allocation2] sm:$0x3]
          %611 = vst.msk [vmem:[%s308] sm:$0x3] %vm603, %v610
        $region48: #{tpu_custom_call.1} parent=31 // pred_fallthru
          _
        %s612 = sand.u32 %s152, 1
        %s613 = scalar_lea.sflag [#allocation5], %s612
        %s614 = sand.u32 %s152, 1
        %s615 = smul.addr %s614, 2
        %s616 = scalar_lea.vmem [#allocation8], %s615
        // Predicated region
        $region49: #{tpu_custom_call.1} parent=31 // pred_check
          %p617 = pneg %p162
        $region50: #{tpu_custom_call.1} parent=31 // pred_check_branch
          %619 = sbr.rel (%p617) target = $region52
        $region51: #{tpu_custom_call.1} parent=31 // pred_region
          %s621 = ssub.s32 32, 32
          %622 = vsyncadd %s613, %s621
          %s623 = smul.addr %s28, 2
          %s624 = smul.addr %s623, 16
          %s625 = scalar_lea.hbm %s3, %s624
          %s627 = sshll.u32 %s616, 4
          %s628 = int_to_ptr.vmem [resolvable:$true] %s627
          %630 = dma.vmem_to_hbm [thread:$0]  %s628, 32, %s625, %s613
        $region52: #{tpu_custom_call.1} parent=31 // pred_fallthru
          _
      $region32: #{tpu_custom_call.1} parent=5 // pred_fallthru
        _
      %p631 = scmp.le.s32.totalorder 2, %s18
      // Predicated region
      $region53: #{tpu_custom_call.1} parent=5 // pred_check
        %p632 = pneg %p631
      $region54: #{tpu_custom_call.1} parent=5 // pred_check_branch
        %634 = sbr.rel (%p632) target = $region56
      $region55: #{tpu_custom_call.1} parent=5 // pred_region
        %s635 = ssub.s32 %s18, 2
        // Predicated region
        $region57: #{tpu_custom_call.1} parent=55 // pred_check
          %p636 = pneg %p168
        $region58: #{tpu_custom_call.1} parent=55 // pred_check_branch
          %638 = sbr.rel (%p636) target = $region60
        $region59: #{tpu_custom_call.1} parent=55 // pred_region
          %s639 = sand.u32 %s153, 1
          %s640 = scalar_lea.sflag [#allocation5], %s639
          %s641 = sand.u32 %s153, 1
          %s642 = smul.addr %s641, 2
          %s643 = scalar_lea.vmem [#allocation8], %s642
          %644 = dma.done %s640, 32
        $region60: #{tpu_custom_call.1} parent=55 // pred_fallthru
          _
      $region56: #{tpu_custom_call.1} parent=5 // pred_fallthru
        _
    $region6: #{tpu_custom_call.1} parent=1 // loop_footer
      %s22 = sadd.s32 1, %s18
    $region7: #{tpu_custom_call.1} parent=1 // loop_footer_branch
      %17 = sbr.rel target = $region3
    $region8: #{tpu_custom_call.1} parent=1 // loop_exit
      _
    %645 = vsyncpa [#allocation4], 1
    %s646 = scalar_lea.sflag [#allocation4], 1
    %647 = vsyncpa %s646, 1
    %648 = vsyncpa [#allocation7], 1
    %s649 = scalar_lea.sflag [#allocation7], 1
    %650 = vsyncpa %s649, 1
    %651 = vsyncpa [#allocation5], 1
    %s652 = scalar_lea.sflag [#allocation5], 1
    %653 = vsyncpa %s652, 1

</llo_original>
